<compile_context>
chip_gen: v7x
topology: tpu7x:2x2x1
jax: 0.10.0
libtpu: 0.0.40
codegen_flags: <defaults>
</compile_context>

<pallas_src>
import jax
import jax.numpy as jnp
from jax.experimental import pallas as pl
from jax.experimental.pallas import tpu as pltpu

_LANE = 128
_SUBLANE = 8


# ----------------------------------------------------------------------------
# Kernel: per-row dot product on the VPU + lane reduce (XLU), scalar bias add.
# ----------------------------------------------------------------------------
def _linear_kernel(x_ref, w_ref, b_ref, o_ref):
    """x_ref: (TN, F) VMEM   w_ref: (1, F) VMEM (resident across grid steps)
    b_ref: (1, 1)  SMEM   o_ref: (TN, 1) VMEM
    """
    prod = x_ref[...].astype(jnp.float32) * w_ref[...].astype(jnp.float32)
    acc = jnp.sum(prod, axis=-1, keepdims=True)           # (TN, 1) f32
    o_ref[...] = (acc + b_ref[0, 0]).astype(o_ref.dtype)


# ----------------------------------------------------------------------------
# Generation-aware VMEM budget + bytes-based batch-tile sizing.
# ----------------------------------------------------------------------------
def _vmem_limit_bytes():
    """Scoped-VMEM limit to request, by TPU generation (None -> keep default)."""
    try:
        kind = jax.devices()[0].device_kind.lower()
    except Exception:
        kind = ""
    if any(tag in kind for tag in ("v4", "v5", "v6")):
        return 100 << 20      # 128 MiB physical VMEM -> plenty of headroom
    if "7" in kind:
        return 46 << 20       # v7x: 64 MiB physical per TensorCore
    return None               # unknown gen: keep the (>=16 MiB) default limit


def _pick_batch_tile(n, f, *, working_set_bytes):
    """Largest batch tile TN whose double-buffered working set fits the budget.

    Per-row cost:
      x tile (double-buffered):              2 * F * 4 bytes
      (TN, 1) out block, lane-padded to 128,
      double-buffered:                       2 * 128 * 4 bytes
    (The resident (1, F) weight + Mosaic scratch are covered by the reserve
    subtracted by the caller.)
    """
    bytes_per_row = 2 * f * 4 + 2 * _LANE * 4
    max_rows = working_set_bytes // bytes_per_row
    if max_rows < _SUBLANE:
        # TODO(synk): add a K-tiled accumulator path (grid over F marked
        # "arbitrary" with pl.when init/finalize) for n_feature too large to
        # keep the reduction axis untiled in VMEM.
        raise ValueError(
            f"n_feature={f} is too large for the untiled reduction axis "
            f"under a {working_set_bytes} byte VMEM working-set budget.")
    tn = int(max_rows) - int(max_rows) % _SUBLANE
    tn = max(tn, _SUBLANE)
    return n if n <= tn else tn


# ----------------------------------------------------------------------------
# Wrapper
# ----------------------------------------------------------------------------
def linear_net_forward(x, weight, bias, *, batch_tile=None):
    """Pallas forward for LinearNet.

    x:      (N, F) float32
    weight: (1, F) float32   (PyTorch nn.Linear weight layout)
    bias:   (1,)   float32
    returns (N, 1) float32
    """
    n, f = x.shape
    limit = _vmem_limit_bytes()
    # Working-set budget = scoped limit minus a reserve for the resident
    # weight, semaphores and Mosaic internal scratch.
    budget = max(((limit if limit is not None else (16 << 20)) - (8 << 20)),
                 4 << 20)

    if batch_tile is None:
        tn = _pick_batch_tile(n, f, working_set_bytes=budget)
    else:
        tn = min(int(batch_tile), n)
        if tn < n:                                  # multi-tile: keep (8,·) legal
            tn = max(_SUBLANE, tn - tn % _SUBLANE)
    grid = (pl.cdiv(n, tn),)

    w2 = weight.reshape(1, f)                       # lane-dense, resident
    b2 = bias.reshape(1, 1).astype(jnp.float32)     # scalar, lives in SMEM

    cost = pl.CostEstimate(
        flops=2 * n * f,
        transcendentals=0,
        bytes_accessed=4 * (n * f + f + n + 1),
    )

    return pl.pallas_call(
        _linear_kernel,
        out_shape=jax.ShapeDtypeStruct((n, 1), x.dtype),
        grid_spec=pltpu.PrefetchScalarGridSpec(
            num_scalar_prefetch=0,
            grid=grid,
            in_specs=[
                # x: one batch tile per grid step.  Remainder tiles read
                # padded rows past N — safe: the reduction is strictly
                # per-row and out-of-range output rows are discarded.
                pl.BlockSpec((tn, f), lambda i: (i, 0)),
                # weight: resident across all grid steps.
                pl.BlockSpec((1, f), lambda i: (0, 0)),
                # bias: scalar in SMEM (no padded VMEM tile / per-step DMA).
                pl.BlockSpec(memory_space=pltpu.MemorySpace.SMEM),
            ],
            out_specs=pl.BlockSpec((tn, 1), lambda i: (i, 0)),
        ),
        compiler_params=pltpu.CompilerParams(
            dimension_semantics=("parallel",),      # independent batch tiles
            vmem_limit_bytes=limit,
        ),
        cost_estimate=cost,
    )(x, w2, b2)


# ----------------------------------------------------------------------------
# Self-test (small shapes)
# ----------------------------------------------------------------------------
if __name__ == "__main__":
    key = jax.random.PRNGKey(0)
    k_x, k_w, k_b = jax.random.split(key, 3)

    def _check(batch, n_feature, **kwargs):
        x = jax.random.normal(k_x, (batch, n_feature), dtype=jnp.float32)
        weight = jax.random.normal(k_w, (1, n_feature), dtype=jnp.float32) * 0.1
        bias = jax.random.normal(k_b, (1,), dtype=jnp.float32) * 0.1

        out = jax.block_until_ready(
            linear_net_forward(x, weight, bias, **kwargs))
        ref = x @ weight.T + bias
        assert out.shape == (batch, 1)
        assert jnp.allclose(out, ref, atol=1e-4, rtol=1e-4), (batch, n_feature)

    # Demo size from the module spec (single tile).
    _check(batch=8, n_feature=32)
    # Classic single-feature linear regression.
    _check(batch=64, n_feature=1)
    # Multi-tile path with a non-multiple remainder tile.
    _check(batch=40, n_feature=32, batch_tile=16)
    # Larger feature count + remainder tile.
    _check(batch=300, n_feature=256, batch_tile=128)

    print("KERNEL_OK")
</pallas_src>

<mosaic_0001>
module attributes {stable_mosaic.version = 11 : i64} {
  func.func @_linear_kernel(%arg0: i32, %arg1: memref<8x32xf32, #tpu.memory_space<vmem>>, %arg2: memref<1x32xf32, #tpu.memory_space<vmem>>, %arg3: memref<1x1xf32, #tpu.memory_space<smem>>, %arg4: memref<8x1xf32, #tpu.memory_space<vmem>>) attributes {dimension_semantics = [#tpu.dimension_semantics<parallel>], iteration_bounds = array<i64: 1>, scalar_prefetch = 0 : i64, scratch_operands = 0 : i64, tpu.core_type = #tpu.core_type<tc>, window_params = [{transform_indices = @transform_0, window_bounds = array<i64: 8, 32>}, {pipeline_mode = #tpu.pipeline_mode<synchronous>, transform_indices = @transform_1, window_bounds = array<i64: 1, 32>}, {transform_indices = @transform_2, window_bounds = array<i64: 1, 1>}, {transform_indices = @transform_3, window_bounds = array<i64: 8, 1>}]} {
    %c0 = arith.constant 0 : index
    %c0_0 = arith.constant 0 : index
    %0 = vector.load %arg1[%c0, %c0_0] : memref<8x32xf32, #tpu.memory_space<vmem>>, vector<8x32xf32>
    %c0_1 = arith.constant 0 : index
    %c0_2 = arith.constant 0 : index
    %1 = vector.load %arg2[%c0_1, %c0_2] : memref<1x32xf32, #tpu.memory_space<vmem>>, vector<1x32xf32>
    %2 = vector.broadcast %1 : vector<1x32xf32> to vector<8x32xf32>
    %3 = arith.mulf %0, %2 : vector<8x32xf32>
    %cst = arith.constant dense<0.000000e+00> : vector<8xf32>
    %4 = vector.multi_reduction <add>, %3, %cst [1] : vector<8x32xf32> to vector<8xf32>
    %5 = vector.shape_cast %4 : vector<8xf32> to vector<8x1xf32>
    %c0_3 = arith.constant 0 : index
    %c0_4 = arith.constant 0 : index
    %6 = memref.load %arg3[%c0_3, %c0_4] : memref<1x1xf32, #tpu.memory_space<smem>>
    %7 = vector.broadcast %6 : f32 to vector<8x1xf32>
    %8 = arith.addf %5, %7 : vector<8x1xf32>
    %c0_5 = arith.constant 0 : index
    %c0_6 = arith.constant 0 : index
    %9 = vector.load %arg4[%c0_5, %c0_6] : memref<8x1xf32, #tpu.memory_space<vmem>>, vector<8x1xf32>
    tpu.vector_store %arg4[%c0_5, %c0_6], %8 {strides = array<i32>} : memref<8x1xf32, #tpu.memory_space<vmem>>, vector<8x1xf32>,
    return
  }
  func.func @transform_0(%arg0: i32) -> (i32, i32) {
    %c0_i32 = arith.constant 0 : i32
    %c0_i32_0 = arith.constant 0 : i32
    return %arg0, %c0_i32 : i32, i32
  }
  func.func @transform_1(%arg0: i32) -> (i32, i32) {
    %c0_i32 = arith.constant 0 : i32
    %c0_i32_0 = arith.constant 0 : i32
    %c0_i32_1 = arith.constant 0 : i32
    return %c0_i32, %c0_i32_0 : i32, i32
  }
  func.func @transform_2(%arg0: i32) -> (i32, i32) {
    %c0_i32 = arith.constant 0 : i32
    %c0_i32_0 = arith.constant 0 : i32
    %c0_i32_1 = arith.constant 0 : i32
    return %c0_i32, %c0_i32_0 : i32, i32
  }
  func.func @transform_3(%arg0: i32) -> (i32, i32) {
    %c0_i32 = arith.constant 0 : i32
    %c0_i32_0 = arith.constant 0 : i32
    return %arg0, %c0_i32 : i32, i32
  }
}

</mosaic_0001>

<llo_original>
// kernel: tpu_custom_call.1
$region0: #{tpu_custom_call.1}
  #allocation0 [shape = 'u32[]', space=smem, size = 0x4, offset = 0x4, fixed_abs, tag = 'smem constant byte address 0x4 - core index']
  #allocation1 [shape = 'u32[144,128]{1,0:T(1,128)}', space=vmem, size = 0x12000, scoped, tag = 'internal scratch']
  #allocation2 [shape = 'f32[1,1]{1,0:T(1,128)S(6)}', space=smem, size = 0x200, scoped, tag = 'scoped memory for tpu_custom_call.1']
  %s0 = inlined_call_operand.hbm [shape: f32[8,32], index: 0, kind: input, shape index: {}]
  %s1 = inlined_call_operand.vmem [shape: f32[1,32], index: 1, kind: input, shape index: {}]
  %s2 = inlined_call_operand.<no memory space> [shape: f32[1,1], index: 2, kind: input, shape index: {}]
  %s3 = inlined_call_operand.vmem [shape: f32[8,1], index: 3, kind: output, shape index: {}]
  %s4 = sld [smem:[#allocation0]]
  $region26: #{tpu_custom_call.1} parent=0
    _
  %s6 = ssub.s32 1, %s4
  %s7 = scalar_select 0, %s6, %s4
  %8 = sst [smem:[#allocation2]] %s2
  $region1: #{tpu_custom_call.1} parent=0
    #allocation3 [shape = 'u8[4096]{0}', space=vmem, size = 0x1000, scoped, tag = 'input window, operand 0, single buffered']
    #allocation4 [shape = 's32[1]{0}', space=sflag, size = 0x4, scoped, tag = 'scoped memory for tpu_custom_call.1']
    %9 = vsyncpa [#allocation4], 0
    // Predicated region
    $region2: #{tpu_custom_call.1} parent=1 // pred_check
      _
    $region3: #{tpu_custom_call.1} parent=1 // pred_check_branch
      %11 = sbr.rel (0) target = $region5
    $region4: #{tpu_custom_call.1} parent=1 // pred_region
      %s13 = ssub.s32 128, 128
      %14 = vsyncadd [#allocation4], %s13
      %s16 = sshll.u32 [#allocation3], 4
      %s17 = int_to_ptr.vmem [resolvable:$true] %s16
      %19 = dma.hbm_to_vmem [thread:$0]  %s0, 128, %s17, [#allocation4]
    $region5: #{tpu_custom_call.1} parent=1 // pred_fallthru
      _
    // Predicated region
    $region6: #{tpu_custom_call.1} parent=1 // pred_check
      _
    $region7: #{tpu_custom_call.1} parent=1 // pred_check_branch
      %21 = sbr.rel (0) target = $region9
    $region8: #{tpu_custom_call.1} parent=1 // pred_region
      _
    $region9: #{tpu_custom_call.1} parent=1 // pred_fallthru
      _
    // Predicated region
    $region10: #{tpu_custom_call.1} parent=1 // pred_check
      _
    $region11: #{tpu_custom_call.1} parent=1 // pred_check_branch
      %23 = sbr.rel (0) target = $region13
    $region12: #{tpu_custom_call.1} parent=1 // pred_region
      _
    $region13: #{tpu_custom_call.1} parent=1 // pred_fallthru
      _
    // Predicated region
    $region14: #{tpu_custom_call.1} parent=1 // pred_check
      _
    $region15: #{tpu_custom_call.1} parent=1 // pred_check_branch
      %25 = sbr.rel (0) target = $region17
    $region16: #{tpu_custom_call.1} parent=1 // pred_region
      %26 = dma.done [#allocation4], 128
    $region17: #{tpu_custom_call.1} parent=1 // pred_fallthru
      _
    %v27 = vld [vmem:[#allocation3] sm:$0xff]
    %v28 = vld [vmem:[%s1] sm:$0x1]
    %v30 = vlaneseq
    %v31 = vshrl.u32 %v30, 7
    %v32 = vsub.s32 0, %v31
    %v33 = vrot.slane %v28, %v32
    %v35 = vmul.f32 %v27, %v33
    %vm36 = vcmask 261120
    %v37 = vsel %vm36, %v35, 0.0
    %38 = vadd.xlane.f32.xlu0 %v37
    %v39 = vpop.xlane.xlu0 %38
    %s40 = sld [smem:[#allocation2]]
    %v41 = vstv %s40
    %v42 = vadd.f32 %v39, %v41
    %vm43 = vcmask 7168
    %44 = vst.msk [vmem:[%s3] sm:$0xff] %vm43, %v42
    // Predicated region
    $region18: #{tpu_custom_call.1} parent=1 // pred_check
      _
    $region19: #{tpu_custom_call.1} parent=1 // pred_check_branch
      %46 = sbr.rel (0) target = $region21
    $region20: #{tpu_custom_call.1} parent=1 // pred_region
      _
    $region21: #{tpu_custom_call.1} parent=1 // pred_fallthru
      _
    // Predicated region
    $region22: #{tpu_custom_call.1} parent=1 // pred_check
      _
    $region23: #{tpu_custom_call.1} parent=1 // pred_check_branch
      %48 = sbr.rel (0) target = $region25
    $region24: #{tpu_custom_call.1} parent=1 // pred_region
      _
    $region25: #{tpu_custom_call.1} parent=1 // pred_fallthru
      _
    %49 = vsyncpa [#allocation4], 1

</llo_original>
